<compile_context>
chip_gen: v5e
topology: v5e:2x2
jax: 0.10.0
libtpu: 0.0.40
codegen_flags: <defaults>
</compile_context>

<pallas_src>
import functools

import jax
import jax.numpy as jnp
from jax.experimental import pallas as pl
from jax.experimental.pallas import tpu as pltpu

# TODO(synk): the original torch file references an undefined global
# `negative_slope`; we expose it as a parameter defaulting to 0.01
# (torch.nn.LeakyReLU default).
NEGATIVE_SLOPE = 0.01

GROUP = 16          # original rows packed per kernel row: 16 * 8 out-ch = 128 lanes
C_IN = 3
C_OUT = 8


def _round_up(x, m):
    return (x + m - 1) // m * m


def _fused_linear_leaky_kernel(x_ref, a_ref, b_ref, o_ref, *, negative_slope):
    # x_ref: (rt, 48)   natural-layout input tile (16 rows x 3 ch per kernel row)
    # a_ref: (48, 128)  constant block-diagonal kron(I_16, W^T)
    # b_ref: (1, 128)   bias tiled 16x along lanes
    # o_ref: (rt, 128)  natural-layout output tile (16 rows x 8 ch per kernel row)
    y = jnp.dot(x_ref[...], a_ref[...], preferred_element_type=jnp.float32)
    y = y + b_ref[...]
    o_ref[...] = jnp.where(y > 0, y, y * negative_slope).astype(o_ref.dtype)


def _pick_block_rows(g, r_max=4096):
    """Rows of the grouped view per grid step (multiple of 8)."""
    g8 = _round_up(g, 8)
    if g8 <= 16:
        return g8
    # Prefer >=2 grid steps (v7x has two TensorCores) while keeping blocks big;
    # r_max=4096 keeps the double-buffered working set (2 MiB in + 2 MiB out per
    # buffer) inside v5e's 16 MiB scoped-VMEM default.
    return min(r_max, _round_up((g8 + 1) // 2, 8))


def fused_linear_leaky(x_grouped, a_mat, bias_lane, *, negative_slope=NEGATIVE_SLOPE):
    """x_grouped: (G, 48) f32; a_mat: (48, 128); bias_lane: (1, 128) -> (G, 128)."""
    g, kin = x_grouped.shape
    lanes = a_mat.shape[1]
    rt = _pick_block_rows(g)
    grid = (pl.cdiv(g, rt),)   # partial tail block handled by Pallas (pad/discard)

    kernel = functools.partial(_fused_linear_leaky_kernel,
                               negative_slope=negative_slope)

    return pl.pallas_call(
        kernel,
        out_shape=jax.ShapeDtypeStruct((g, lanes), x_grouped.dtype),
        grid_spec=pltpu.PrefetchScalarGridSpec(
            num_scalar_prefetch=0,
            grid=grid,
            in_specs=[
                pl.BlockSpec((rt, kin), lambda i: (i, 0)),      # natural input tile
                pl.BlockSpec((kin, lanes), lambda i: (0, 0)),   # constant (48,128)
                pl.BlockSpec((1, lanes), lambda i: (0, 0)),     # bias lane tile
            ],
            out_specs=pl.BlockSpec((rt, lanes), lambda i: (i, 0)),
        ),
        compiler_params=pltpu.CompilerParams(
            dimension_semantics=("parallel",),
        ),
    )(x_grouped, a_mat, bias_lane)


def model_forward(x_nhwc, w, b, *, negative_slope=NEGATIVE_SLOPE):
    """x: (N, H, W, 3) -> Linear(3, 8) over last dim + LeakyReLU -> (N, H, W, 8).

    w is torch Linear layout (out_features=8, in_features=3); b is (8,).
    All reshapes below are contiguous (free); no HBM transpose is materialized.
    The channel de/re-interleave is folded into a block-diagonal matmul.
    """
    n, h, wd, c_in = x_nhwc.shape
    c_out = w.shape[0]
    m = n * h * wd

    x2 = x_nhwc.reshape(m, c_in)                                # free reshape
    m_pad = _round_up(m, GROUP)
    if m_pad != m:
        # TODO(synk): only hit when N*H*W % 16 != 0; costs one copy of x.
        x2 = jnp.pad(x2, ((0, m_pad - m), (0, 0)))
    g = m_pad // GROUP
    x_grouped = x2.reshape(g, GROUP * c_in)                     # (G, 48), free

    dt = x_nhwc.dtype
    a_mat = jnp.kron(jnp.eye(GROUP, dtype=dt), w.T.astype(dt))              # (48, 128)
    bias_lane = jnp.tile(b.astype(dt), GROUP).reshape(1, GROUP * c_out)     # (1, 128)

    out_g = fused_linear_leaky(x_grouped, a_mat, bias_lane,
                               negative_slope=negative_slope)   # (G, 128)
    out = out_g.reshape(m_pad, c_out)                           # free reshape
    if m_pad != m:
        out = out[:m]
    return out.reshape(n, h, wd, c_out)                         # free reshape


if __name__ == "__main__":
    key = jax.random.PRNGKey(0)
    k_x, k_w, k_b = jax.random.split(key, 3)

    # Small input consistent with the module: Linear expects last dim = 3.
    N, H, W = 2, 16, 16
    x = jax.random.normal(k_x, (N, H, W, C_IN), dtype=jnp.float32)

    # Deterministic parameters in torch Linear layout: weight (8, 3), bias (8,).
    bound = 1.0 / (C_IN ** 0.5)
    w = jax.random.uniform(k_w, (C_OUT, C_IN), jnp.float32, -bound, bound)
    b = jax.random.uniform(k_b, (C_OUT,), jnp.float32, -bound, bound)

    out = jax.jit(model_forward)(x, w, b)
    jax.block_until_ready(out)

    # Reference check in plain JAX.
    ref = x.reshape(-1, C_IN) @ w.T + b
    ref = jnp.where(ref > 0, ref, ref * NEGATIVE_SLOPE).reshape(N, H, W, C_OUT)
    assert out.shape == (N, H, W, C_OUT)
    assert jnp.allclose(out, ref, atol=1e-4, rtol=1e-4)

    print("KERNEL_OK")
</pallas_src>

<mosaic_0001>
module attributes {stable_mosaic.version = 11 : i64} {
  func.func @_fused_linear_leaky_kernel(%arg0: i32, %arg1: memref<16x48xf32, #tpu.memory_space<vmem>>, %arg2: memref<48x128xf32, #tpu.memory_space<vmem>>, %arg3: memref<1x128xf32, #tpu.memory_space<vmem>>, %arg4: memref<16x128xf32, #tpu.memory_space<vmem>>) attributes {dimension_semantics = [#tpu.dimension_semantics<parallel>], iteration_bounds = array<i64: 2>, scalar_prefetch = 0 : i64, scratch_operands = 0 : i64, tpu.core_type = #tpu.core_type<tc>, window_params = [{transform_indices = @transform_0, window_bounds = array<i64: 16, 48>}, {pipeline_mode = #tpu.pipeline_mode<synchronous>, transform_indices = @transform_1, window_bounds = array<i64: 48, 128>}, {pipeline_mode = #tpu.pipeline_mode<synchronous>, transform_indices = @transform_2, window_bounds = array<i64: 1, 128>}, {transform_indices = @transform_3, window_bounds = array<i64: 16, 128>}]} {
    %c0 = arith.constant 0 : index
    %c0_0 = arith.constant 0 : index
    %0 = vector.load %arg1[%c0, %c0_0] : memref<16x48xf32, #tpu.memory_space<vmem>>, vector<16x48xf32>
    %c0_1 = arith.constant 0 : index
    %c0_2 = arith.constant 0 : index
    %1 = vector.load %arg2[%c0_1, %c0_2] : memref<48x128xf32, #tpu.memory_space<vmem>>, vector<48x128xf32>
    %cst = arith.constant dense<0.000000e+00> : vector<16x128xf32>
    %2 = tpu.matmul %0, %1, %cst {dimension_numbers = #tpu.dot_dimension_numbers<[1], [0], [0], [1], [0, 0, 1, 1], [], []>} : vector<16x48xf32>, vector<48x128xf32>, vector<16x128xf32> -> vector<16x128xf32>
    %c0_3 = arith.constant 0 : index
    %c0_4 = arith.constant 0 : index
    %3 = vector.load %arg3[%c0_3, %c0_4] : memref<1x128xf32, #tpu.memory_space<vmem>>, vector<1x128xf32>
    %4 = vector.broadcast %3 : vector<1x128xf32> to vector<16x128xf32>
    %5 = arith.addf %2, %4 : vector<16x128xf32>
    %cst_5 = arith.constant 0.000000e+00 : f32
    %6 = vector.broadcast %cst_5 : f32 to vector<16x128xf32>
    %7 = arith.cmpf ogt, %5, %6 : vector<16x128xf32>
    %cst_6 = arith.constant 0.00999999977 : f32
    %8 = vector.broadcast %cst_6 : f32 to vector<16x128xf32>
    %9 = arith.mulf %5, %8 : vector<16x128xf32>
    %10 = arith.select %7, %5, %9 : vector<16x128xi1>, vector<16x128xf32>
    %c0_7 = arith.constant 0 : index
    %c0_8 = arith.constant 0 : index
    %11 = vector.load %arg4[%c0_7, %c0_8] : memref<16x128xf32, #tpu.memory_space<vmem>>, vector<16x128xf32>
    tpu.vector_store %arg4[%c0_7, %c0_8], %10 {strides = array<i32>} : memref<16x128xf32, #tpu.memory_space<vmem>>, vector<16x128xf32>,
    return
  }
  func.func @transform_0(%arg0: i32) -> (i32, i32) {
    %c0_i32 = arith.constant 0 : i32
    %c0_i32_0 = arith.constant 0 : i32
    return %arg0, %c0_i32 : i32, i32
  }
  func.func @transform_1(%arg0: i32) -> (i32, i32) {
    %c0_i32 = arith.constant 0 : i32
    %c0_i32_0 = arith.constant 0 : i32
    %c0_i32_1 = arith.constant 0 : i32
    return %c0_i32, %c0_i32_0 : i32, i32
  }
  func.func @transform_2(%arg0: i32) -> (i32, i32) {
    %c0_i32 = arith.constant 0 : i32
    %c0_i32_0 = arith.constant 0 : i32
    %c0_i32_1 = arith.constant 0 : i32
    return %c0_i32, %c0_i32_0 : i32, i32
  }
  func.func @transform_3(%arg0: i32) -> (i32, i32) {
    %c0_i32 = arith.constant 0 : i32
    %c0_i32_0 = arith.constant 0 : i32
    return %arg0, %c0_i32 : i32, i32
  }
}

</mosaic_0001>

<llo_original>
// kernel: tile.8
$region0: #{tile.8}
  #allocation0 [shape = 's32[1]{0}', space=sflag, size = 0x4, scoped, tag = 'scoped memory for tile.8']
  %s0 = inlined_call_operand.vmem [shape: f32[8], index: 0, kind: input, shape index: {}]
  %s1 = inlined_call_operand.vmem [shape: f32[16,8], index: 1, kind: output, shape index: {}]
  // Predicated region
  $region2: #{tile.8} parent=0 // pred_check
    _
  $region3: #{tile.8} parent=0 // pred_check_branch
    %3 = sbr.rel (0) target = $region5
  $region4: #{tile.8} parent=0 // pred_region
    _
  $region5: #{tile.8} parent=0 // pred_fallthru
    _
  %v4 = vld [vmem:[%s0] ss:$0 sm:$0xff]
  %5 = vst [vmem:[%s1] sm:$0xff] %v4
  %s6 = scalar_lea.vmem %s1, 8
  %7 = vst [vmem:[%s6] sm:$0xff] %v4

// kernel: tile.9
$region0: #{tile.9}
  %s0 = inlined_call_operand.vmem [shape: f32[16,8], index: 0, kind: input, shape index: {}]
  %s1 = inlined_call_operand.vmem [shape: f32[1,128], index: 1, kind: output, shape index: {}]
  $region1: #{tile.9} parent=0
    #allocation0 [shape = 'u8[4096]{0}', space=vmem, size = 0x1000, scoped, tag = 'scoped mem for output reshape']
    %v2 = vld [vmem:[%s0] sm:$0x1]
    %vm3 = vcmask 64512
    %4 = vst.msk [vmem:[#allocation0] sm:$0x1] %vm3, %v2
    %s5 = scalar_lea.vmem %s0, 15
    %v6 = vld [vmem:[%s5] sm:$0x1]
    %7 = vrot.lane.b32.xlu0 %v6, 120
    %v8 = vpop.permute.xlu0 %7
    %vm9 = vcmask 1048512
    %10 = vst.msk [vmem:[#allocation0] sm:$0x1] %vm9, %v8
    %s11 = scalar_lea.vmem %s0, 14
    %v12 = vld [vmem:[%s11] sm:$0x1]
    %13 = vrot.lane.b32.xlu0 %v12, 112
    %v14 = vpop.permute.xlu0 %13
    %vm15 = vcmask 982912
    %16 = vst.msk [vmem:[#allocation0] sm:$0x1] %vm15, %v14
    %s17 = scalar_lea.vmem %s0, 13
    %v18 = vld [vmem:[%s17] sm:$0x1]
    %19 = vrot.lane.b32.xlu0 %v18, 104
    %v20 = vpop.permute.xlu0 %19
    %vm21 = vcmask 917312
    %22 = vst.msk [vmem:[#allocation0] sm:$0x1] %vm21, %v20
    %s23 = scalar_lea.vmem %s0, 12
    %v24 = vld [vmem:[%s23] sm:$0x1]
    %25 = vrot.lane.b32.xlu0 %v24, 96
    %v26 = vpop.permute.xlu0 %25
    %vm27 = vcmask 851712
    %28 = vst.msk [vmem:[#allocation0] sm:$0x1] %vm27, %v26
    %s29 = scalar_lea.vmem %s0, 11
    %v30 = vld [vmem:[%s29] sm:$0x1]
    %31 = vrot.lane.b32.xlu0 %v30, 88
    %v32 = vpop.permute.xlu0 %31
    %vm33 = vcmask 786112
    %34 = vst.msk [vmem:[#allocation0] sm:$0x1] %vm33, %v32
    %s35 = scalar_lea.vmem %s0, 10
    %v36 = vld [vmem:[%s35] sm:$0x1]
    %37 = vrot.lane.b32.xlu0 %v36, 80
    %v38 = vpop.permute.xlu0 %37
    %vm39 = vcmask 720512
    %40 = vst.msk [vmem:[#allocation0] sm:$0x1] %vm39, %v38
    %s41 = scalar_lea.vmem %s0, 9
    %v42 = vld [vmem:[%s41] sm:$0x1]
    %43 = vrot.lane.b32.xlu0 %v42, 72
    %v44 = vpop.permute.xlu0 %43
    %vm45 = vcmask 654912
    %46 = vst.msk [vmem:[#allocation0] sm:$0x1] %vm45, %v44
    %s47 = scalar_lea.vmem %s0, 8
    %v48 = vld [vmem:[%s47] sm:$0x1]
    %49 = vrot.lane.b32.xlu0 %v48, 64
    %v50 = vpop.permute.xlu0 %49
    %vm51 = vcmask 589312
    %52 = vst.msk [vmem:[#allocation0] sm:$0x1] %vm51, %v50
    %s53 = scalar_lea.vmem %s0, 7
    %v54 = vld [vmem:[%s53] sm:$0x1]
    %55 = vrot.lane.b32.xlu0 %v54, 56
    %v56 = vpop.permute.xlu0 %55
    %vm57 = vcmask 523712
    %58 = vst.msk [vmem:[#allocation0] sm:$0x1] %vm57, %v56
    %s59 = scalar_lea.vmem %s0, 6
    %v60 = vld [vmem:[%s59] sm:$0x1]
    %61 = vrot.lane.b32.xlu0 %v60, 48
    %v62 = vpop.permute.xlu0 %61
    %vm63 = vcmask 458112
    %64 = vst.msk [vmem:[#allocation0] sm:$0x1] %vm63, %v62
    %s65 = scalar_lea.vmem %s0, 5
    %v66 = vld [vmem:[%s65] sm:$0x1]
    %67 = vrot.lane.b32.xlu0 %v66, 40
    %v68 = vpop.permute.xlu0 %67
    %vm69 = vcmask 392512
    %70 = vst.msk [vmem:[#allocation0] sm:$0x1] %vm69, %v68
    %s71 = scalar_lea.vmem %s0, 4
    %v72 = vld [vmem:[%s71] sm:$0x1]
    %73 = vrot.lane.b32.xlu0 %v72, 32
    %v74 = vpop.permute.xlu0 %73
    %vm75 = vcmask 326912
    %76 = vst.msk [vmem:[#allocation0] sm:$0x1] %vm75, %v74
    %s77 = scalar_lea.vmem %s0, 3
    %v78 = vld [vmem:[%s77] sm:$0x1]
    %79 = vrot.lane.b32.xlu0 %v78, 24
    %v80 = vpop.permute.xlu0 %79
    %vm81 = vcmask 261312
    %82 = vst.msk [vmem:[#allocation0] sm:$0x1] %vm81, %v80
    %s83 = scalar_lea.vmem %s0, 2
    %v84 = vld [vmem:[%s83] sm:$0x1]
    %85 = vrot.lane.b32.xlu0 %v84, 16
    %v86 = vpop.permute.xlu0 %85
    %vm87 = vcmask 195712
    %88 = vst.msk [vmem:[#allocation0] sm:$0x1] %vm87, %v86
    %s89 = scalar_lea.vmem %s0, 1
    %v90 = vld [vmem:[%s89] sm:$0x1]
    %91 = vrot.lane.b32.xlu0 %v90, 8
    %v92 = vpop.permute.xlu0 %91
    %vm93 = vcmask 130112
    %94 = vst.msk [vmem:[#allocation0] sm:$0x1] %vm93, %v92
    %s96 = ssub.s32 2, 1
    %v97 = vld [vmem:[#allocation0] sm:%s96]
    %s99 = ssub.s32 2, 1
    %100 = vst [vmem:[%s1] sm:%s99] %v97

// kernel: model_forward.1
$region0: #{model_forward.1}
  #allocation0 [shape = 'u32[]', space=smem, size = 0x4, offset = 0x4, fixed_abs, tag = 'smem constant byte address 0x4 - core index']
  #allocation1 [shape = 'u32[72,128]{1,0:T(1,128)}', space=vmem, size = 0x9000, scoped, tag = 'internal scratch']
  %s0 = inlined_call_operand.vmem [shape: f32[32,48], index: 0, kind: input, shape index: {}]
  %s1 = inlined_call_operand.vmem [shape: f32[48,128], index: 1, kind: input, shape index: {}]
  %s2 = inlined_call_operand.vmem [shape: f32[1,128], index: 2, kind: input, shape index: {}]
  %s3 = inlined_call_operand.vmem [shape: f32[32,128], index: 3, kind: output, shape index: {}]
  %s4 = sld [smem:[#allocation0]]
  $region45: #{model_forward.1} parent=0
    _
  %s6 = ssub.s32 1, %s4
  %s7 = scalar_select 0, %s6, %s4
  loop: start=0, step=1, limit=4
  $region2: #{model_forward.1} parent=0 // loop_pre_header
    _
  $region3: #{model_forward.1} parent=0 // loop_header
    %s9 = sphi 0, %s13
    %p10 = scmp.ge.s32.totalorder %s9, 4
    %s19 = sphi 0, %s21
    %s22 = sphi 0, %s19
    %s23 = sphi 0, %s22
    %s39 = sphi 0, %s23
    %s43 = sphi 0, %s43
    %s45 = sphi 0, %s43
    %s46 = sphi 0, %s45
    %s60 = sphi 0, %s46
    %s64 = sphi 0, %s64
    %s66 = sphi 0, %s64
    %s67 = sphi 0, %s66
    %s81 = sphi 0, %s67
    %s87 = sphi 0, %s89
    %s90 = sphi 0, %s87
    %s91 = sphi 0, %s90
    %s107 = sphi 0, %s91
  $region4: #{model_forward.1} parent=0 // loop_header_branch
    %12 = sbr.rel (%p10) target = $region8
  $region5: #{model_forward.1} parent=0 // loop_body
    %s14 = ssub.s32 %s9, 1
    %s15 = ssub.s32 %s9, 2
    %s16 = sadd.s32 %s9, 1
    %s17 = ssub.s32 %s9, %s16
    %p18 = scmp.eq.s32.totalorder %s17, 0
    %s20 = sadd.s32 %s19, 1
    %s21 = scalar_select %p18, %s19, %s20
    %p24 = pneg %p18
    %p25 = scmp.eq.s32.totalorder %s9, 1
    %p26 = por %p24, %p25
    %p27 = scmp.ne.s32.totalorder %s19, %s22
    %p28 = scmp.eq.s32.totalorder %s9, 0
    %p29 = por %p27, %p28
    %p30 = scmp.ne.s32.totalorder %s19, %s22
    %p31 = scmp.eq.s32.totalorder %s14, 1
    %p32 = por %p30, %p31
    %p33 = scmp.ne.s32.totalorder %s22, %s23
    %p34 = scmp.eq.s32.totalorder %s14, 0
    %p35 = por %p33, %p34
    %p36 = scmp.ne.s32.totalorder %s22, %s23
    %p37 = scmp.eq.s32.totalorder %s15, 1
    %p38 = por %p36, %p37
    %p40 = scmp.ne.s32.totalorder %s23, %s39
    %p41 = scmp.eq.s32.totalorder %s15, 0
    %p42 = por %p40, %p41
    %s44 = sadd.s32 %s43, 1
    %p47 = scmp.eq.s32.totalorder %s9, 1
    %p48 = scmp.ne.s32.totalorder %s43, %s45
    %p49 = scmp.eq.s32.totalorder %s9, 0
    %p50 = por %p48, %p49
    %p51 = scmp.ne.s32.totalorder %s43, %s45
    %p52 = scmp.eq.s32.totalorder %s14, 1
    %p53 = por %p51, %p52
    %p54 = scmp.ne.s32.totalorder %s45, %s46
    %p55 = scmp.eq.s32.totalorder %s14, 0
    %p56 = por %p54, %p55
    %p57 = scmp.ne.s32.totalorder %s45, %s46
    %p58 = scmp.eq.s32.totalorder %s15, 1
    %p59 = por %p57, %p58
    %p61 = scmp.ne.s32.totalorder %s46, %s60
    %p62 = scmp.eq.s32.totalorder %s15, 0
    %p63 = por %p61, %p62
    %s65 = sadd.s32 %s64, 1
    %p68 = scmp.eq.s32.totalorder %s9, 1
    %p69 = scmp.ne.s32.totalorder %s64, %s66
    %p70 = scmp.eq.s32.totalorder %s9, 0
    %p71 = por %p69, %p70
    %p72 = scmp.ne.s32.totalorder %s64, %s66
    %p73 = scmp.eq.s32.totalorder %s14, 1
    %p74 = por %p72, %p73
    %p75 = scmp.ne.s32.totalorder %s66, %s67
    %p76 = scmp.eq.s32.totalorder %s14, 0
    %p77 = por %p75, %p76
    %p78 = scmp.ne.s32.totalorder %s66, %s67
    %p79 = scmp.eq.s32.totalorder %s15, 1
    %p80 = por %p78, %p79
    %p82 = scmp.ne.s32.totalorder %s67, %s81
    %p83 = scmp.eq.s32.totalorder %s15, 0
    %p84 = por %p82, %p83
    %s85 = ssub.s32 %s9, %s16
    %p86 = scmp.eq.s32.totalorder %s85, 0
    %s88 = sadd.s32 %s87, 1
    %s89 = scalar_select %p86, %s87, %s88
    %p92 = pneg %p86
    %p93 = scmp.eq.s32.totalorder %s9, 1
    %p94 = por %p92, %p93
    %p95 = scmp.ne.s32.totalorder %s87, %s90
    %p96 = scmp.eq.s32.totalorder %s9, 0
    %p97 = por %p95, %p96
    %p98 = scmp.ne.s32.totalorder %s87, %s90
    %p99 = scmp.eq.s32.totalorder %s14, 1
    %p100 = por %p98, %p99
    %p101 = scmp.ne.s32.totalorder %s90, %s91
    %p102 = scmp.eq.s32.totalorder %s14, 0
    %p103 = por %p101, %p102
    %p104 = scmp.ne.s32.totalorder %s90, %s91
    %p105 = scmp.eq.s32.totalorder %s15, 1
    %p106 = por %p104, %p105
    %p108 = scmp.ne.s32.totalorder %s91, %s107
    %p109 = scmp.eq.s32.totalorder %s15, 0
    %p110 = por %p108, %p109
    %p111 = scmp.le.s32.totalorder 1, %s9
    %p112 = scmp.lt.s32.totalorder %s9, 3
    %p113 = pnand %p111, %p112
    %p114 = pneg %p113
    // Predicated region
    $region9: #{model_forward.1} parent=5 // pred_check
      _
    $region10: #{model_forward.1} parent=5 // pred_check_branch
      %116 = sbr.rel (%p113) target = $region12
    $region11: #{model_forward.1} parent=5 // pred_region
      %s117 = ssub.s32 %s9, 1
      // Predicated region
      $region13: #{model_forward.1} parent=11 // pred_check
        %p118 = pneg %p56
      $region14: #{model_forward.1} parent=11 // pred_check_branch
        %120 = sbr.rel (%p118) target = $region16
      $region15: #{model_forward.1} parent=11 // pred_region
        _
      $region16: #{model_forward.1} parent=11 // pred_fallthru
        _
      // Predicated region
      $region17: #{model_forward.1} parent=11 // pred_check
        %p121 = pneg %p77
      $region18: #{model_forward.1} parent=11 // pred_check_branch
        %123 = sbr.rel (%p121) target = $region20
      $region19: #{model_forward.1} parent=11 // pred_region
        _
      $region20: #{model_forward.1} parent=11 // pred_fallthru
        _
    $region12: #{model_forward.1} parent=5 // pred_fallthru
      _
    %p124 = scmp.lt.s32.totalorder %s9, 2
    // Predicated region
    $region21: #{model_forward.1} parent=5 // pred_check
      %p125 = pneg %p124
    $region22: #{model_forward.1} parent=5 // pred_check_branch
      %127 = sbr.rel (%p125) target = $region24
    $region23: #{model_forward.1} parent=5 // pred_region
      // Predicated region
      $region25: #{model_forward.1} parent=23 // pred_check
        %p128 = pneg %p29
      $region26: #{model_forward.1} parent=23 // pred_check_branch
        %130 = sbr.rel (%p128) target = $region28
      $region27: #{model_forward.1} parent=23 // pred_region
        %s131 = smul.u32 2, %s9
        %p132 = scmp.lt.s32.totalorder %s131, 3
        %s133 = scalar_select %p132, %s131, 3
        %s134 = smul.addr %s133, 8
        %s135 = scalar_lea.vmem %s0, %s134
        %s136 = smul.u32 2, %s9
      $region28: #{model_forward.1} parent=23 // pred_fallthru
        _
    $region24: #{model_forward.1} parent=5 // pred_fallthru
      _
    %p137 = scmp.le.s32.totalorder 1, %s9
    %p138 = scmp.lt.s32.totalorder %s9, 3
    %p139 = pnand %p137, %p138
    %p140 = pneg %p139
    // Predicated region
    $region29: #{model_forward.1} parent=5 // pred_check
      _
    $region30: #{model_forward.1} parent=5 // pred_check_branch
      %142 = sbr.rel (%p139) target = $region32
    $region31: #{model_forward.1} parent=5 // pred_region
      %s143 = ssub.s32 %s9, 1
      %s144 = smul.u32 2, %s14
      %p145 = scmp.lt.s32.totalorder %s144, 3
      %s146 = scalar_select %p145, %s144, 3
      %s147 = smul.addr %s146, 8
      %s148 = scalar_lea.vmem %s0, %s147
      %p149 = pneg %p35
      %p150 = pneg %p32
      %p151 = pneg %p56
      %p152 = pneg %p53
      %p153 = pneg %p77
      %p154 = pneg %p74
      %p155 = pneg %p103
      %p156 = pneg %p100
      %s157 = smul.u32 2, %s14
      %p158 = scmp.lt.s32.totalorder %s157, 3
      %s159 = scalar_select %p158, %s157, 3
      %s160 = smul.addr %s159, 8
      %s161 = scalar_lea.vmem %s3, %s160
      %s162 = smul.u32 2, %s14
      %p163 = scmp.lt.s32.totalorder %s162, 3
      %s164 = scalar_select %p163, %s162, 3
      %s165 = smul.addr %s164, 8
      %s166 = scalar_lea.vmem %s0, %s165
      %s167 = smul.u32 2, %s14
      %s168 = smul.u32 2, %s14
      %p169 = scmp.lt.s32.totalorder %s168, 3
      %s170 = scalar_select %p169, %s168, 3
      %s171 = smul.addr %s170, 8
      %s172 = scalar_lea.vmem %s3, %s171
      %s173 = smul.u32 2, %s14
      %v174 = vld [vmem:[%s166] sm:$0xff]
      %v175 = vld [vmem:[%s166 + $0x8] sm:$0xff]
      %v176 = vld [vmem:[%s1] sm:$0xff]
      %v177 = vld [vmem:[%s1 + $0x8] sm:$0xff]
      %v178 = vld [vmem:[%s1 + $0x10] sm:$0xff]
      %v179 = vld [vmem:[%s1 + $0x18] sm:$0xff]
      %v180 = vld [vmem:[%s1 + $0x20] sm:$0xff]
      %v181 = vld [vmem:[%s1 + $0x28] sm:$0xff]
      %v182 = vld [vmem:[%s2] sm:$0x1]
      %v184 = vperm.slane %v182, 0
      %vm186 = vcmask 392192
      %v188 = vsel %vm186, %v174, 0
      %v191 = vsel %vm186, %v175, 0
      %193 = vmatpush.msra.mxu0 0.0
      %194 = vmatpush.msra.mxu0 0.0
      %195 = vmatpush.msra.mxu0 0.0
      %196 = vmatpush.msra.mxu0 0.0
      %197 = vmatpush.msra.mxu0 0.0
      %198 = vmatpush.msra.mxu0 0.0
      %199 = vmatpush.msra.mxu0 0.0
      %200 = vmatpush.msra.mxu0 0.0
      %201 = vmatpush.msra.mxu0 0.0
      %202 = vmatpush.msra.mxu0 0.0
      %203 = vmatpush.msra.mxu0 %v181
      %204 = vmatpush.msra.mxu0 %v180
      %205 = vmatpush.msra.mxu0 %v179
      %206 = vmatpush.msra.mxu0 %v178
      %207 = vmatpush.msra.mxu0 %v177
      %208 = vmatpush.msra.mxu0 %v176
      %209 = vmatmul.f32.gmra.mxu0 %v188
      %v210 = vpop.f32.mrf.mxu0
      %v211 = vadd.f32 %v184, %v210
      %212 = vmatmul.f32.gmra.mxu0 %v191
      %v213 = vpop.f32.mrf.mxu0
      %v214 = vadd.f32 %v184, %v213
      %215 = vdwg.mxu0
      %vm216 = vcmp.gt.f32.partialorder %v211, 0.0
      %vm217 = vcmp.gt.f32.partialorder %v214, 0.0
      %v218 = vmul.f32 %v211, 0.01
      %v219 = vmul.f32 %v214, 0.01
      %v220 = vsel %vm216, %v211, %v218
      %v221 = vsel %vm217, %v214, %v219
      %222 = vst [vmem:[%s172] sm:$0xff] %v220
      %223 = vst [vmem:[%s172 + $0x8] sm:$0xff] %v221
      %s224 = smul.u32 2, %s14
      %p225 = scmp.lt.s32.totalorder %s224, 3
      %s226 = scalar_select %p225, %s224, 3
      %s227 = smul.addr %s226, 8
      %s228 = scalar_lea.vmem %s3, %s227
      // Predicated region
      $region33: #{model_forward.1} parent=31 // pred_check
        %p229 = pneg %p100
      $region34: #{model_forward.1} parent=31 // pred_check_branch
        %231 = sbr.rel (%p229) target = $region36
      $region35: #{model_forward.1} parent=31 // pred_region
        %s232 = smul.u32 2, %s14
      $region36: #{model_forward.1} parent=31 // pred_fallthru
        _
    $region32: #{model_forward.1} parent=5 // pred_fallthru
      _
    %p233 = scmp.le.s32.totalorder 2, %s9
    // Predicated region
    $region37: #{model_forward.1} parent=5 // pred_check
      %p234 = pneg %p233
    $region38: #{model_forward.1} parent=5 // pred_check_branch
      %236 = sbr.rel (%p234) target = $region40
    $region39: #{model_forward.1} parent=5 // pred_region
      %s237 = ssub.s32 %s9, 2
      // Predicated region
      $region41: #{model_forward.1} parent=39 // pred_check
        %p238 = pneg %p106
      $region42: #{model_forward.1} parent=39 // pred_check_branch
        %240 = sbr.rel (%p238) target = $region44
      $region43: #{model_forward.1} parent=39 // pred_region
        %s241 = smul.u32 2, %s15
        %p242 = scmp.lt.s32.totalorder %s241, 3
        %s243 = scalar_select %p242, %s241, 3
        %s244 = smul.addr %s243, 8
        %s245 = scalar_lea.vmem %s3, %s244
      $region44: #{model_forward.1} parent=39 // pred_fallthru
        _
    $region40: #{model_forward.1} parent=5 // pred_fallthru
      _
  $region6: #{model_forward.1} parent=0 // loop_footer
    %s13 = sadd.s32 1, %s9
  $region7: #{model_forward.1} parent=0 // loop_footer_branch
    %8 = sbr.rel target = $region3
  $region8: #{model_forward.1} parent=0 // loop_exit
    _

</llo_original>
